<compile_context>
chip_gen: v7x
topology: tpu7x:2x2x1
jax: 0.10.0
libtpu: 0.0.40
codegen_flags: <defaults>
</compile_context>

<pallas_src>
import math
import jax
import jax.numpy as jnp
from jax.experimental import pallas as pl
from jax.experimental.pallas import tpu as pltpu


# ---------------------------------------------------------------------------
# Kernel: one (tm, Kf) x (Kf, tn) MXU matmul + bias per grid step.
# All tiles are lane-dense (last dim is the full array dim or a multiple of 128),
# so stores are unmasked and the HBM DMAs are contiguous.
# ---------------------------------------------------------------------------
def _demixing_kernel(x_ref, w_ref, b_ref, o_ref):
    acc = jnp.dot(x_ref[...], w_ref[...], preferred_element_type=jnp.float32)
    o_ref[...] = (acc + b_ref[...].astype(jnp.float32)).astype(o_ref.dtype)


def _choose_tiles(mf, kf, nf, itemsize, vmem_budget_bytes=20 << 20):
    """Pick (tm, tn) from a VMEM budget (double-buffered x/out tiles + weight tile)."""
    # N tile: keep the whole (folded) out dim unless the weight tile gets large.
    tn = nf if nf <= 512 else 512
    while tn >= 256 and tn % 256 == 0 and kf * tn * itemsize > (4 << 20):
        tn //= 2  # stays a multiple of 128

    # Sublane alignment for the M tile (8 for f32, 16 for bf16, 32 for int8).
    sublane = max(8, 32 // max(itemsize, 1))
    if mf <= sublane:
        return mf, tn  # tiny problem: a single full block is always legal

    budget = max(vmem_budget_bytes - 2 * kf * tn * itemsize, 2 << 20)
    per_row = 2 * (kf + tn) * itemsize  # x row + out row, double-buffered
    tm = int(budget // per_row)
    tm = max(min(tm, 32768), sublane)
    if tm >= mf:
        # Keep >= 2 steps on the parallel M axis so both v7x TensorCores get work
        # (and the software pipeline has something to overlap).
        tm = pl.cdiv(mf, 2)
    tm = max((tm // sublane) * sublane, sublane)
    return min(tm, mf), tn


def demixing_2d(x2d, weight, bias):
    """out[m, n] = sum_k x2d[m, k] * weight[k, n] + bias[n]   (M, K) -> (M, N)."""
    m, k = x2d.shape
    k2, n = weight.shape
    assert k == k2, (k, k2)
    out_dtype = x2d.dtype
    itemsize = jnp.dtype(out_dtype).itemsize

    # Fold F consecutive rows into the lane dim so output tiles are >=128 lanes wide.
    if n < 128 and 128 % n == 0:
        f = 128 // n
        while f > 1 and m % f != 0:
            f //= 2
    else:
        f = 1

    mf, kf, nf = m // f, f * k, f * n
    x_f = x2d.reshape(mf, kf)  # contiguous -> free
    if f > 1:
        # Block-diagonal weight: the MXU emits the folded (lane-dense) output directly.
        w_f = jnp.kron(jnp.eye(f, dtype=weight.dtype), weight)  # (kf, nf)
        b_f = jnp.tile(bias, f).reshape(1, nf)
    else:
        w_f = weight
        b_f = bias.reshape(1, nf)

    tm, tn = _choose_tiles(mf, kf, nf, itemsize)
    grid = (pl.cdiv(mf, tm), pl.cdiv(nf, tn))  # ragged M/N handled by Pallas masking

    out_f = pl.pallas_call(
        _demixing_kernel,
        out_shape=jax.ShapeDtypeStruct((mf, nf), out_dtype),
        grid_spec=pltpu.PrefetchScalarGridSpec(
            num_scalar_prefetch=0,
            grid=grid,
            in_specs=[
                pl.BlockSpec((tm, kf), lambda i, j: (i, 0)),  # x tile (reused over j)
                pl.BlockSpec((kf, tn), lambda i, j: (0, j)),  # weight tile
                pl.BlockSpec((1, tn), lambda i, j: (0, j)),   # bias tile
            ],
            out_specs=pl.BlockSpec((tm, tn), lambda i, j: (i, j)),
        ),
        compiler_params=pltpu.CompilerParams(
            dimension_semantics=("parallel", "parallel"),
            vmem_limit_bytes=32 * 1024 * 1024,  # safe on v5e/v6e (128 MiB) and v7x (64 MiB)
        ),
    )(x_f, w_f, b_f)

    return out_f.reshape(m, n)  # contiguous -> free


def demixing_forward(x, weight, bias):
    """Equivalent of Demixing.forward: tensordot over axis 1 of x, + bias."""
    k, n = weight.shape
    # Move the contracted axis last. This is one extra (small) pass over x in HBM,
    # but x is the narrow side (C_in channels) and channels-last is what lets the
    # MXU produce lane-dense folded output tiles (output dominates HBM traffic).
    x_moved = jnp.moveaxis(x, 1, -1)
    lead = x_moved.shape[:-1]
    x2d = x_moved.reshape(-1, k)
    out2d = demixing_2d(x2d, weight, bias)
    return out2d.reshape(*lead, n)


def init_demixing_params(key, in_features, out_features, dtype=jnp.float32):
    """Deterministic init mimicking kaiming_uniform_(a=sqrt(5)) + uniform bias."""
    kw, kb = jax.random.split(key)
    w_bound = math.sqrt(1.0 / in_features)  # kaiming_uniform with a=sqrt(5), fan_in=in
    weight = jax.random.uniform(
        kw, (in_features, out_features), dtype, minval=-w_bound, maxval=w_bound)
    b_bound = 1.0 / math.sqrt(in_features)
    bias = jax.random.uniform(
        kb, (out_features,), dtype, minval=-b_bound, maxval=b_bound)
    return weight, bias


if __name__ == "__main__":
    key = jax.random.PRNGKey(0)
    k_x, k_p, k_x2 = jax.random.split(key, 3)

    B, C_in, H, W = 2, 4, 16, 16
    C_out = 32

    x = jax.random.normal(k_x, (B, C_in, H, W), jnp.float32)
    weight, bias = init_demixing_params(k_p, C_in, C_out)

    fwd = jax.jit(demixing_forward)

    out = jax.block_until_ready(fwd(x, weight, bias))
    ref = jnp.tensordot(x, weight, axes=[[1], [0]]) + bias
    assert out.shape == ref.shape == (B, H, W, C_out), (out.shape, ref.shape)
    assert jnp.allclose(out, ref, atol=1e-5, rtol=1e-5)

    # Non-power-of-two spatial size: exercises the ragged (cdiv) M grid path.
    x2 = jax.random.normal(k_x2, (B, C_in, 10, 10), jnp.float32)
    out2 = jax.block_until_ready(fwd(x2, weight, bias))
    ref2 = jnp.tensordot(x2, weight, axes=[[1], [0]]) + bias
    assert out2.shape == ref2.shape == (B, 10, 10, C_out)
    assert jnp.allclose(out2, ref2, atol=1e-5, rtol=1e-5)

    print("KERNEL_OK")
</pallas_src>

<mosaic_0001>
module attributes {stable_mosaic.version = 11 : i64} {
  func.func @_demixing_kernel(%arg0: i32, %arg1: i32, %arg2: memref<64x16xf32, #tpu.memory_space<vmem>>, %arg3: memref<16x128xf32, #tpu.memory_space<vmem>>, %arg4: memref<1x128xf32, #tpu.memory_space<vmem>>, %arg5: memref<64x128xf32, #tpu.memory_space<vmem>>) attributes {dimension_semantics = [#tpu.dimension_semantics<parallel>, #tpu.dimension_semantics<parallel>], iteration_bounds = array<i64: 2, 1>, scalar_prefetch = 0 : i64, scratch_operands = 0 : i64, tpu.core_type = #tpu.core_type<tc>, window_params = [{transform_indices = @transform_0, window_bounds = array<i64: 64, 16>}, {transform_indices = @transform_1, window_bounds = array<i64: 16, 128>}, {transform_indices = @transform_2, window_bounds = array<i64: 1, 128>}, {transform_indices = @transform_3, window_bounds = array<i64: 64, 128>}]} {
    %c0 = arith.constant 0 : index
    %c0_0 = arith.constant 0 : index
    %0 = vector.load %arg2[%c0, %c0_0] : memref<64x16xf32, #tpu.memory_space<vmem>>, vector<64x16xf32>
    %c0_1 = arith.constant 0 : index
    %c0_2 = arith.constant 0 : index
    %1 = vector.load %arg3[%c0_1, %c0_2] : memref<16x128xf32, #tpu.memory_space<vmem>>, vector<16x128xf32>
    %cst = arith.constant dense<0.000000e+00> : vector<64x128xf32>
    %2 = tpu.matmul %0, %1, %cst {dimension_numbers = #tpu.dot_dimension_numbers<[1], [0], [0], [1], [0, 0, 1, 1], [], []>} : vector<64x16xf32>, vector<16x128xf32>, vector<64x128xf32> -> vector<64x128xf32>
    %c0_3 = arith.constant 0 : index
    %c0_4 = arith.constant 0 : index
    %3 = vector.load %arg4[%c0_3, %c0_4] : memref<1x128xf32, #tpu.memory_space<vmem>>, vector<1x128xf32>
    %4 = vector.broadcast %3 : vector<1x128xf32> to vector<64x128xf32>
    %5 = arith.addf %2, %4 : vector<64x128xf32>
    %c0_5 = arith.constant 0 : index
    %c0_6 = arith.constant 0 : index
    %6 = vector.load %arg5[%c0_5, %c0_6] : memref<64x128xf32, #tpu.memory_space<vmem>>, vector<64x128xf32>
    tpu.vector_store %arg5[%c0_5, %c0_6], %5 {strides = array<i32>} : memref<64x128xf32, #tpu.memory_space<vmem>>, vector<64x128xf32>,
    return
  }
  func.func @transform_0(%arg0: i32, %arg1: i32) -> (i32, i32) {
    %c0_i32 = arith.constant 0 : i32
    %c0_i32_0 = arith.constant 0 : i32
    return %arg0, %c0_i32 : i32, i32
  }
  func.func @transform_1(%arg0: i32, %arg1: i32) -> (i32, i32) {
    %c0_i32 = arith.constant 0 : i32
    %c0_i32_0 = arith.constant 0 : i32
    return %c0_i32, %arg1 : i32, i32
  }
  func.func @transform_2(%arg0: i32, %arg1: i32) -> (i32, i32) {
    %c0_i32 = arith.constant 0 : i32
    %c0_i32_0 = arith.constant 0 : i32
    return %c0_i32, %arg1 : i32, i32
  }
  func.func @transform_3(%arg0: i32, %arg1: i32) -> (i32, i32) {
    %c0_i32 = arith.constant 0 : i32
    return %arg0, %arg1 : i32, i32
  }
}

</mosaic_0001>

<llo_original>
// kernel: tile.9
$region0: #{tile.9}
  %s0 = inlined_call_operand.vmem [shape: f32[4,32], index: 0, kind: input, shape index: {}]
  %s1 = inlined_call_operand.vmem [shape: f32[1,128], index: 1, kind: output, shape index: {}]
  $region1: #{tile.9} parent=0
    #allocation0 [shape = 'u8[4096]{0}', space=vmem, size = 0x1000, scoped, tag = 'scoped mem for output reshape']
    #allocation1 [shape = 'u8[4096]{0}', space=vmem, size = 0x1000, scoped, tag = 'scoped mem for input reshape']
    %s3 = sshllo.u32 0, 4
    %v4 = vld [vmem:[%s0] sm:%s3]
    %5 = vst [vmem:[#allocation1] sm:%s3] %v4
    %v6 = vld [vmem:[#allocation1] sm:$0x1]
    %vm7 = vcmask 261120
    %8 = vst.msk [vmem:[#allocation0] sm:$0x1] %vm7, %v6
    %s9 = scalar_lea.vmem [#allocation1], 3
    %v10 = vld [vmem:[%s9] sm:$0x1]
    %11 = vrot.lane.b32.xlu0 %v10, 96
    %v12 = vpop.permute.xlu0 %11
    %vm13 = vcmask 1048320
    %14 = vst.msk [vmem:[#allocation0] sm:$0x1] %vm13, %v12
    %s15 = scalar_lea.vmem [#allocation1], 2
    %v16 = vld [vmem:[%s15] sm:$0x1]
    %17 = vrot.lane.b32.xlu0 %v16, 64
    %v18 = vpop.permute.xlu0 %17
    %vm19 = vcmask 785920
    %20 = vst.msk [vmem:[#allocation0] sm:$0x1] %vm19, %v18
    %s21 = scalar_lea.vmem [#allocation1], 1
    %v22 = vld [vmem:[%s21] sm:$0x1]
    %23 = vrot.lane.b32.xlu0 %v22, 32
    %v24 = vpop.permute.xlu0 %23
    %vm25 = vcmask 523520
    %26 = vst.msk [vmem:[#allocation0] sm:$0x1] %vm25, %v24
    %s28 = sshllo.u32 0, 1
    %v30 = vld [vmem:[#allocation0] sm:%s28]
    %s31 = sshllo.u32 0, 1
    %32 = vst [vmem:[%s1] sm:%s31] %v30

// kernel: tile.8
$region0: #{tile.8}
  #allocation0 [shape = 's32[1]{0}', space=sflag, size = 0x4, scoped, tag = 'scoped memory for tile.8']
  %s0 = inlined_call_operand.vmem [shape: f32[32], index: 0, kind: input, shape index: {}]
  %s1 = inlined_call_operand.vmem [shape: f32[4,32], index: 1, kind: output, shape index: {}]
  // Predicated region
  $region2: #{tile.8} parent=0 // pred_check
    _
  $region3: #{tile.8} parent=0 // pred_check_branch
    %3 = sbr.rel (0) target = $region5
  $region4: #{tile.8} parent=0 // pred_region
    _
  $region5: #{tile.8} parent=0 // pred_fallthru
    _
  %v4 = vld [vmem:[%s0] ss:$0 sm:$0xff]
  %5 = vst [vmem:[%s1] sm:$0xf] %v4

// kernel: demixing_forward.1
$region0: #{demixing_forward.1}
  #allocation0 [shape = 'u32[]', space=smem, size = 0x4, offset = 0x4, fixed_abs, tag = 'smem constant byte address 0x4 - core index']
  #allocation1 [shape = 'u32[144,128]{1,0:T(1,128)}', space=vmem, size = 0x12000, scoped, tag = 'internal scratch']
  %s0 = inlined_call_operand.vmem [shape: f32[128,16], index: 0, kind: input, shape index: {}]
  %s1 = inlined_call_operand.vmem [shape: f32[16,128], index: 1, kind: input, shape index: {}]
  %s2 = inlined_call_operand.vmem [shape: f32[1,128], index: 2, kind: input, shape index: {}]
  %s3 = inlined_call_operand.vmem [shape: f32[128,128], index: 3, kind: output, shape index: {}]
  %s4 = sld [smem:[#allocation0]]
  $region45: #{demixing_forward.1} parent=0
    _
  %s6 = ssub.s32 1, %s4
  %s7 = scalar_select 0, %s6, %s4
  loop: start=0, step=1, limit=4
  $region2: #{demixing_forward.1} parent=0 // loop_pre_header
    _
  $region3: #{demixing_forward.1} parent=0 // loop_header
    %s9 = sphi 0, %s13
    %p10 = scmp.ge.s32.totalorder %s9, 4
    %s16 = sphi 0, %s28
    %s17 = sphi 0, %s24
    %s18 = sphi 0, %s16
    %s19 = sphi 0, %s17
    %s20 = sphi 0, %s18
    %s21 = sphi 0, %s19
    %s31 = sphi 0, %s33
    %s34 = sphi 0, %s31
    %s35 = sphi 0, %s34
    %s51 = sphi 0, %s35
    %s57 = sphi 0, %s59
    %s60 = sphi 0, %s57
    %s61 = sphi 0, %s60
    %s77 = sphi 0, %s61
    %s83 = sphi 0, %s85
    %s86 = sphi 0, %s83
    %s87 = sphi 0, %s86
    %s103 = sphi 0, %s87
    %s111 = sphi 0, %s113
    %s114 = sphi 0, %s111
    %s115 = sphi 0, %s114
    %s131 = sphi 0, %s115
  $region4: #{demixing_forward.1} parent=0 // loop_header_branch
    %12 = sbr.rel (%p10) target = $region8
  $region5: #{demixing_forward.1} parent=0 // loop_body
    %s14 = ssub.s32 %s9, 1
    %s15 = ssub.s32 %s9, 2
    %s22 = sadd.s32 1, %s17
    %p23 = scmp.ge.s32.totalorder %s22, 1
    %s24 = scalar_select %p23, 0, %s22
    %s25 = sadd.s32 1, %s16
    %s26 = scalar_select %p23, %s25, %s16
    %p27 = scmp.ge.s32.totalorder %s26, 2
    %s28 = scalar_select %p27, 0, %s26
    %s29 = ssub.s32 %s16, %s28
    %p30 = scmp.eq.s32.totalorder %s29, 0
    %s32 = sadd.s32 %s31, 1
    %s33 = scalar_select %p30, %s31, %s32
    %p36 = pneg %p30
    %p37 = scmp.eq.s32.totalorder %s9, 1
    %p38 = por %p36, %p37
    %p39 = scmp.ne.s32.totalorder %s31, %s34
    %p40 = scmp.eq.s32.totalorder %s9, 0
    %p41 = por %p39, %p40
    %p42 = scmp.ne.s32.totalorder %s31, %s34
    %p43 = scmp.eq.s32.totalorder %s14, 1
    %p44 = por %p42, %p43
    %p45 = scmp.ne.s32.totalorder %s34, %s35
    %p46 = scmp.eq.s32.totalorder %s14, 0
    %p47 = por %p45, %p46
    %p48 = scmp.ne.s32.totalorder %s34, %s35
    %p49 = scmp.eq.s32.totalorder %s15, 1
    %p50 = por %p48, %p49
    %p52 = scmp.ne.s32.totalorder %s35, %s51
    %p53 = scmp.eq.s32.totalorder %s15, 0
    %p54 = por %p52, %p53
    %s55 = ssub.s32 %s17, %s24
    %p56 = scmp.eq.s32.totalorder %s55, 0
    %s58 = sadd.s32 %s57, 1
    %s59 = scalar_select %p56, %s57, %s58
    %p62 = pneg %p56
    %p63 = scmp.eq.s32.totalorder %s9, 1
    %p64 = por %p62, %p63
    %p65 = scmp.ne.s32.totalorder %s57, %s60
    %p66 = scmp.eq.s32.totalorder %s9, 0
    %p67 = por %p65, %p66
    %p68 = scmp.ne.s32.totalorder %s57, %s60
    %p69 = scmp.eq.s32.totalorder %s14, 1
    %p70 = por %p68, %p69
    %p71 = scmp.ne.s32.totalorder %s60, %s61
    %p72 = scmp.eq.s32.totalorder %s14, 0
    %p73 = por %p71, %p72
    %p74 = scmp.ne.s32.totalorder %s60, %s61
    %p75 = scmp.eq.s32.totalorder %s15, 1
    %p76 = por %p74, %p75
    %p78 = scmp.ne.s32.totalorder %s61, %s77
    %p79 = scmp.eq.s32.totalorder %s15, 0
    %p80 = por %p78, %p79
    %s81 = ssub.s32 %s17, %s24
    %p82 = scmp.eq.s32.totalorder %s81, 0
    %s84 = sadd.s32 %s83, 1
    %s85 = scalar_select %p82, %s83, %s84
    %p88 = pneg %p82
    %p89 = scmp.eq.s32.totalorder %s9, 1
    %p90 = por %p88, %p89
    %p91 = scmp.ne.s32.totalorder %s83, %s86
    %p92 = scmp.eq.s32.totalorder %s9, 0
    %p93 = por %p91, %p92
    %p94 = scmp.ne.s32.totalorder %s83, %s86
    %p95 = scmp.eq.s32.totalorder %s14, 1
    %p96 = por %p94, %p95
    %p97 = scmp.ne.s32.totalorder %s86, %s87
    %p98 = scmp.eq.s32.totalorder %s14, 0
    %p99 = por %p97, %p98
    %p100 = scmp.ne.s32.totalorder %s86, %s87
    %p101 = scmp.eq.s32.totalorder %s15, 1
    %p102 = por %p100, %p101
    %p104 = scmp.ne.s32.totalorder %s87, %s103
    %p105 = scmp.eq.s32.totalorder %s15, 0
    %p106 = por %p104, %p105
    %s107 = ssub.s32 %s16, %s28
    %s108 = ssub.s32 %s17, %s24
    %s109 = sor.u32 %s107, %s108
    %p110 = scmp.eq.s32.totalorder %s109, 0
    %s112 = sadd.s32 %s111, 1
    %s113 = scalar_select %p110, %s111, %s112
    %p116 = pneg %p110
    %p117 = scmp.eq.s32.totalorder %s9, 1
    %p118 = por %p116, %p117
    %p119 = scmp.ne.s32.totalorder %s111, %s114
    %p120 = scmp.eq.s32.totalorder %s9, 0
    %p121 = por %p119, %p120
    %p122 = scmp.ne.s32.totalorder %s111, %s114
    %p123 = scmp.eq.s32.totalorder %s14, 1
    %p124 = por %p122, %p123
    %p125 = scmp.ne.s32.totalorder %s114, %s115
    %p126 = scmp.eq.s32.totalorder %s14, 0
    %p127 = por %p125, %p126
    %p128 = scmp.ne.s32.totalorder %s114, %s115
    %p129 = scmp.eq.s32.totalorder %s15, 1
    %p130 = por %p128, %p129
    %p132 = scmp.ne.s32.totalorder %s115, %s131
    %p133 = scmp.eq.s32.totalorder %s15, 0
    %p134 = por %p132, %p133
    %p135 = scmp.le.s32.totalorder 1, %s9
    %p136 = scmp.lt.s32.totalorder %s9, 3
    %p137 = pnand %p135, %p136
    %p138 = pneg %p137
    // Predicated region
    $region9: #{demixing_forward.1} parent=5 // pred_check
      _
    $region10: #{demixing_forward.1} parent=5 // pred_check_branch
      %140 = sbr.rel (%p137) target = $region12
    $region11: #{demixing_forward.1} parent=5 // pred_region
      %s141 = ssub.s32 %s9, 1
      // Predicated region
      $region13: #{demixing_forward.1} parent=11 // pred_check
        %p142 = pneg %p73
      $region14: #{demixing_forward.1} parent=11 // pred_check_branch
        %144 = sbr.rel (%p142) target = $region16
      $region15: #{demixing_forward.1} parent=11 // pred_region
        %p145 = scmp.lt.s32.totalorder %s19, 0
        %s146 = scalar_select %p145, %s19, 0
        %s147 = smul.addr %s146, 8
        %s148 = scalar_lea.vmem %s1, %s147
      $region16: #{demixing_forward.1} parent=11 // pred_fallthru
        _
      // Predicated region
      $region17: #{demixing_forward.1} parent=11 // pred_check
        %p149 = pneg %p99
      $region18: #{demixing_forward.1} parent=11 // pred_check_branch
        %151 = sbr.rel (%p149) target = $region20
      $region19: #{demixing_forward.1} parent=11 // pred_region
        %p152 = scmp.lt.s32.totalorder %s19, 0
        %s153 = scalar_select %p152, %s19, 0
        %s154 = scalar_lea.vmem %s2, %s153
      $region20: #{demixing_forward.1} parent=11 // pred_fallthru
        _
    $region12: #{demixing_forward.1} parent=5 // pred_fallthru
      _
    %p155 = scmp.lt.s32.totalorder %s9, 2
    // Predicated region
    $region21: #{demixing_forward.1} parent=5 // pred_check
      %p156 = pneg %p155
    $region22: #{demixing_forward.1} parent=5 // pred_check_branch
      %158 = sbr.rel (%p156) target = $region24
    $region23: #{demixing_forward.1} parent=5 // pred_region
      // Predicated region
      $region25: #{demixing_forward.1} parent=23 // pred_check
        %p159 = pneg %p41
      $region26: #{demixing_forward.1} parent=23 // pred_check_branch
        %161 = sbr.rel (%p159) target = $region28
      $region27: #{demixing_forward.1} parent=23 // pred_region
        %s162 = smul.u32 8, %s16
        %p163 = scmp.lt.s32.totalorder %s162, 15
        %s164 = scalar_select %p163, %s162, 15
        %s165 = smul.addr %s164, 8
        %s166 = scalar_lea.vmem %s0, %s165
        %s167 = smul.u32 8, %s16
      $region28: #{demixing_forward.1} parent=23 // pred_fallthru
        _
    $region24: #{demixing_forward.1} parent=5 // pred_fallthru
      _
    %p168 = scmp.le.s32.totalorder 1, %s9
    %p169 = scmp.lt.s32.totalorder %s9, 3
    %p170 = pnand %p168, %p169
    %p171 = pneg %p170
    // Predicated region
    $region29: #{demixing_forward.1} parent=5 // pred_check
      _
    $region30: #{demixing_forward.1} parent=5 // pred_check_branch
      %173 = sbr.rel (%p170) target = $region32
    $region31: #{demixing_forward.1} parent=5 // pred_region
      %s174 = ssub.s32 %s9, 1
      %s175 = smul.u32 8, %s18
      %p176 = scmp.lt.s32.totalorder %s175, 15
      %s177 = scalar_select %p176, %s175, 15
      %s178 = smul.addr %s177, 8
      %s179 = scalar_lea.vmem %s0, %s178
      %p180 = pneg %p47
      %p181 = pneg %p44
      %p182 = scmp.lt.s32.totalorder %s19, 0
      %s183 = scalar_select %p182, %s19, 0
      %s184 = smul.addr %s183, 8
      %s185 = scalar_lea.vmem %s1, %s184
      %p186 = pneg %p73
      %p187 = pneg %p70
      %p188 = scmp.lt.s32.totalorder %s19, 0
      %s189 = scalar_select %p188, %s19, 0
      %s190 = scalar_lea.vmem %s2, %s189
      %p191 = pneg %p99
      %p192 = pneg %p96
      %p193 = pneg %p127
      %p194 = pneg %p124
      %s195 = smul.u32 8, %s18
      %p196 = scmp.lt.s32.totalorder %s195, 15
      %s197 = scalar_select %p196, %s195, 15
      %p198 = scmp.lt.s32.totalorder %s19, 0
      %s199 = scalar_select %p198, %s19, 0
      %s200 = sadd.s32 %s199, %s197
      %s201 = smul.addr %s200, 8
      %s202 = scalar_lea.vmem %s3, %s201
      %s203 = smul.u32 8, %s18
      %p204 = scmp.lt.s32.totalorder %s203, 15
      %s205 = scalar_select %p204, %s203, 15
      %s206 = smul.addr %s205, 8
      %s207 = scalar_lea.vmem %s0, %s206
      %s208 = smul.u32 8, %s18
      %p209 = scmp.lt.s32.totalorder %s19, 0
      %s210 = scalar_select %p209, %s19, 0
      %s211 = smul.addr %s210, 8
      %s212 = scalar_lea.vmem %s1, %s211
      %p213 = scmp.lt.s32.totalorder %s19, 0
      %s214 = scalar_select %p213, %s19, 0
      %s215 = scalar_lea.vmem %s2, %s214
      %s216 = smul.u32 8, %s18
      %p217 = scmp.lt.s32.totalorder %s216, 15
      %s218 = scalar_select %p217, %s216, 15
      %p219 = scmp.lt.s32.totalorder %s19, 0
      %s220 = scalar_select %p219, %s19, 0
      %s221 = sadd.s32 %s220, %s218
      %s222 = smul.addr %s221, 8
      %s223 = scalar_lea.vmem %s3, %s222
      %s224 = smul.u32 8, %s18
      %v225 = vld [vmem:[%s207] sm:$0xff]
      %v226 = vld [vmem:[%s207 + $0x8] sm:$0xff]
      %v227 = vld [vmem:[%s207 + $0x10] sm:$0xff]
      %v228 = vld [vmem:[%s207 + $0x18] sm:$0xff]
      %v229 = vld [vmem:[%s207 + $0x20] sm:$0xff]
      %v230 = vld [vmem:[%s207 + $0x28] sm:$0xff]
      %v231 = vld [vmem:[%s207 + $0x30] sm:$0xff]
      %v232 = vld [vmem:[%s207 + $0x38] sm:$0xff]
      %v233 = vld [vmem:[%s212] sm:$0xff]
      %v234 = vld [vmem:[%s212 + $0x8] sm:$0xff]
      %v235 = vld [vmem:[%s215] sm:$0x1]
      %v237 = vlaneseq
      %v238 = vshrl.u32 %v237, 7
      %v239 = vsub.s32 0, %v238
      %v240 = vrot.slane %v235, %v239
      %vm242 = vcmask 130048
      %v244 = vsel %vm242, %v225, 0
      %v247 = vsel %vm242, %v226, 0
      %v250 = vsel %vm242, %v227, 0
      %v253 = vsel %vm242, %v228, 0
      %v256 = vsel %vm242, %v229, 0
      %v259 = vsel %vm242, %v230, 0
      %v262 = vsel %vm242, %v231, 0
      %v265 = vsel %vm242, %v232, 0
      %267 = vmatprep.subr.mxu0 0.0
      %268 = vmatpush1.msra.mxu0 %v233
      %269 = vmatprep.subr.mxu0 0.0
      %270 = vmatpush1.msra.mxu0 %v234
      %271 = vmatprep.subr.mxu0 0.0
      %272 = vmatpush1.msra.mxu0 0.0
      %273 = vmatprep.subr.mxu0 0.0
      %274 = vmatpush1.msra.mxu0 0.0
      %275 = vmatprep.subr.mxu0 0.0
      %276 = vmatpush1.msra.mxu0 0.0
      %277 = vmatprep.subr.mxu0 0.0
      %278 = vmatpush1.msra.mxu0 0.0
      %279 = vmatprep.subr.mxu0 0.0
      %280 = vmatpush1.msra.mxu0 0.0
      %281 = vmatprep.subr.mxu0 0.0
      %282 = vmatpush1.msra.mxu0 0.0
      %283 = vmatprep.subr.mxu0 0.0
      %284 = vmatpush1.msra.mxu0 0.0
      %285 = vmatprep.subr.mxu0 0.0
      %286 = vmatpush1.msra.mxu0 0.0
      %287 = vmatprep.subr.mxu0 0.0
      %288 = vmatpush1.msra.mxu0 0.0
      %289 = vmatprep.subr.mxu0 0.0
      %290 = vmatpush1.msra.mxu0 0.0
      %291 = vmatprep.subr.mxu0 0.0
      %292 = vmatpush1.msra.mxu0 0.0
      %293 = vmatprep.subr.mxu0 0.0
      %294 = vmatpush1.msra.mxu0 0.0
      %295 = vmatprep.subr.mxu0 0.0
      %296 = vmatpush1.msra.mxu0 0.0
      %297 = vmatprep.subr.mxu0 0.0
      %298 = vmatpush1.msra.mxu0 0.0
      %299 = vmatprep.subr.mxu0 0.0
      %300 = vmatpush1.msra.mxu0 0.0
      %301 = vmatprep.subr.mxu0 0.0
      %302 = vmatpush1.msra.mxu0 0.0
      %303 = vmatprep.subr.mxu0 0.0
      %304 = vmatpush1.msra.mxu0 0.0
      %305 = vmatprep.subr.mxu0 0.0
      %306 = vmatpush1.msra.mxu0 0.0
      %307 = vmatprep.subr.mxu0 0.0
      %308 = vmatpush1.msra.mxu0 0.0
      %309 = vmatprep.subr.mxu0 0.0
      %310 = vmatpush1.msra.mxu0 0.0
      %311 = vmatprep.subr.mxu0 0.0
      %312 = vmatpush1.msra.mxu0 0.0
      %313 = vmatprep.subr.mxu0 0.0
      %314 = vmatpush1.msra.mxu0 0.0
      %315 = vmatprep.subr.mxu0 0.0
      %316 = vmatpush1.msra.mxu0 0.0
      %317 = vmatprep.subr.mxu0 0.0
      %318 = vmatpush1.msra.mxu0 0.0
      %319 = vmatprep.subr.mxu0 0.0
      %320 = vmatpush1.msra.mxu0 0.0
      %321 = vmatprep.subr.mxu0 0.0
      %322 = vmatpush1.msra.mxu0 0.0
      %323 = vmatprep.subr.mxu0 0.0
      %324 = vmatpush1.msra.mxu0 0.0
      %325 = vmatprep.subr.mxu0 0.0
      %326 = vmatpush1.msra.mxu0 0.0
      %327 = vmatprep.subr.mxu0 0.0
      %328 = vmatpush1.msra.mxu0 0.0
      %329 = vmatprep.subr.mxu0 0.0
      %330 = vmatpush1.msra.mxu0 0.0
      %331 = vmatprep.mubr.f32.mxu0 0.0
      %332 = vmatmul.mubr.f32.gmra.mrb[0].mxu0 %v244
      %v333 = vpop.f32.mrb[0].mxu0
      %v334 = vadd.f32 %v240, %v333
      %v335 = vpop.f32.mrb[0].mxu0
      %336 = vmatprep.mubr.f32.mxu0 0.0
      %337 = vmatmul.mubr.f32.gmra.mrb[0].mxu0 %v247
      %v338 = vpop.f32.mrb[0].mxu0
      %v339 = vadd.f32 %v240, %v338
      %v340 = vpop.f32.mrb[0].mxu0
      %341 = vmatprep.mubr.f32.mxu0 0.0
      %342 = vmatmul.mubr.f32.gmra.mrb[0].mxu0 %v250
      %v343 = vpop.f32.mrb[0].mxu0
      %v344 = vadd.f32 %v240, %v343
      %v345 = vpop.f32.mrb[0].mxu0
      %346 = vmatprep.mubr.f32.mxu0 0.0
      %347 = vmatmul.mubr.f32.gmra.mrb[0].mxu0 %v253
      %v348 = vpop.f32.mrb[0].mxu0
      %v349 = vadd.f32 %v240, %v348
      %v350 = vpop.f32.mrb[0].mxu0
      %351 = vmatprep.mubr.f32.mxu0 0.0
      %352 = vmatmul.mubr.f32.gmra.mrb[0].mxu0 %v256
      %v353 = vpop.f32.mrb[0].mxu0
      %v354 = vadd.f32 %v240, %v353
      %v355 = vpop.f32.mrb[0].mxu0
      %356 = vmatprep.mubr.f32.mxu0 0.0
      %357 = vmatmul.mubr.f32.gmra.mrb[0].mxu0 %v259
      %v358 = vpop.f32.mrb[0].mxu0
      %v359 = vadd.f32 %v240, %v358
      %v360 = vpop.f32.mrb[0].mxu0
      %361 = vmatprep.mubr.f32.mxu0 0.0
      %362 = vmatmul.mubr.f32.gmra.mrb[0].mxu0 %v262
      %v363 = vpop.f32.mrb[0].mxu0
      %v364 = vadd.f32 %v240, %v363
      %v365 = vpop.f32.mrb[0].mxu0
      %366 = vmatprep.mubr.f32.mxu0 0.0
      %367 = vmatmul.mubr.f32.gmra.mrb[0].mxu0 %v265
      %v368 = vpop.f32.mrb[0].mxu0
      %v369 = vadd.f32 %v240, %v368
      %v370 = vpop.f32.mrb[0].mxu0
      %371 = vdwg.mxu0
      %372 = vst [vmem:[%s223] sm:$0xff] %v334
      %373 = vst [vmem:[%s223 + $0x8] sm:$0xff] %v339
      %374 = vst [vmem:[%s223 + $0x10] sm:$0xff] %v344
      %375 = vst [vmem:[%s223 + $0x18] sm:$0xff] %v349
      %376 = vst [vmem:[%s223 + $0x20] sm:$0xff] %v354
      %377 = vst [vmem:[%s223 + $0x28] sm:$0xff] %v359
      %378 = vst [vmem:[%s223 + $0x30] sm:$0xff] %v364
      %379 = vst [vmem:[%s223 + $0x38] sm:$0xff] %v369
      %s380 = smul.u32 8, %s18
      %p381 = scmp.lt.s32.totalorder %s380, 15
      %s382 = scalar_select %p381, %s380, 15
      %p383 = scmp.lt.s32.totalorder %s19, 0
      %s384 = scalar_select %p383, %s19, 0
      %s385 = sadd.s32 %s384, %s382
      %s386 = smul.addr %s385, 8
      %s387 = scalar_lea.vmem %s3, %s386
      // Predicated region
      $region33: #{demixing_forward.1} parent=31 // pred_check
        %p388 = pneg %p124
      $region34: #{demixing_forward.1} parent=31 // pred_check_branch
        %390 = sbr.rel (%p388) target = $region36
      $region35: #{demixing_forward.1} parent=31 // pred_region
        %s391 = smul.u32 8, %s18
      $region36: #{demixing_forward.1} parent=31 // pred_fallthru
        _
    $region32: #{demixing_forward.1} parent=5 // pred_fallthru
      _
    %p392 = scmp.le.s32.totalorder 2, %s9
    // Predicated region
    $region37: #{demixing_forward.1} parent=5 // pred_check
      %p393 = pneg %p392
    $region38: #{demixing_forward.1} parent=5 // pred_check_branch
      %395 = sbr.rel (%p393) target = $region40
    $region39: #{demixing_forward.1} parent=5 // pred_region
      %s396 = ssub.s32 %s9, 2
      // Predicated region
      $region41: #{demixing_forward.1} parent=39 // pred_check
        %p397 = pneg %p130
      $region42: #{demixing_forward.1} parent=39 // pred_check_branch
        %399 = sbr.rel (%p397) target = $region44
      $region43: #{demixing_forward.1} parent=39 // pred_region
        %s400 = smul.u32 8, %s20
        %p401 = scmp.lt.s32.totalorder %s400, 15
        %s402 = scalar_select %p401, %s400, 15
        %p403 = scmp.lt.s32.totalorder %s21, 0
        %s404 = scalar_select %p403, %s21, 0
        %s405 = sadd.s32 %s404, %s402
        %s406 = smul.addr %s405, 8
        %s407 = scalar_lea.vmem %s3, %s406
      $region44: #{demixing_forward.1} parent=39 // pred_fallthru
        _
    $region40: #{demixing_forward.1} parent=5 // pred_fallthru
      _
  $region6: #{demixing_forward.1} parent=0 // loop_footer
    %s13 = sadd.s32 1, %s9
  $region7: #{demixing_forward.1} parent=0 // loop_footer_branch
    %8 = sbr.rel target = $region3
  $region8: #{demixing_forward.1} parent=0 // loop_exit
    _

</llo_original>
